<compile_context>
chip_gen: v7x
topology: tpu7x:2x2x1
jax: 0.10.0
libtpu: 0.0.40
codegen_flags: <defaults>
</compile_context>

<pallas_src>
import functools

import jax
import jax.numpy as jnp
from jax.experimental import pallas as pl
from jax.experimental.pallas import tpu as pltpu


def _cdiv(a, b):
    return -(-a // b)


def _round_up(x, m):
    return _cdiv(x, m) * m


def _tversky_stepwise_kernel(p_ref, t_ref, out_ref,
                             acc_pt, acc_p, acc_t, acc_pp,
                             *, alpha, beta, eps, d_total, block_d, mask_cols):
    k = pl.program_id(1)
    nk = pl.num_programs(1)
    n_blk = p_ref.shape[0]

    @pl.when(k == 0)
    def _():
        acc_pt[...] = jnp.zeros_like(acc_pt)
        acc_p[...] = jnp.zeros_like(acc_p)
        acc_t[...] = jnp.zeros_like(acc_t)
        acc_pp[...] = jnp.zeros_like(acc_pp)

    full_chunks = block_d // 128
    tail = block_d - full_chunks * 128   # > 0 only for a single full-extent d block

    if mask_cols:
        lane = jax.lax.broadcasted_iota(jnp.int32, (n_blk, 128), 1)
        rem = d_total - k * block_d      # number of valid lanes left in this block

    # ---- hot loop: fold the lane axis in registers (VPU only) ----------------
    pt_l = jnp.zeros((n_blk, 128), jnp.float32)
    p_l = jnp.zeros((n_blk, 128), jnp.float32)
    t_l = jnp.zeros((n_blk, 128), jnp.float32)
    pp_l = jnp.zeros((n_blk, 128), jnp.float32)
    for c in range(full_chunks):
        pc = p_ref[:, c * 128:(c + 1) * 128].astype(jnp.float32)
        tc = t_ref[:, c * 128:(c + 1) * 128].astype(jnp.float32)
        if mask_cols:
            valid = lane < (rem - c * 128)
            pc = jnp.where(valid, pc, 0.0)
            tc = jnp.where(valid, tc, 0.0)
        pt_l = pt_l + pc * tc
        p_l = p_l + pc
        t_l = t_l + tc
        pp_l = pp_l + pc * pc

    # One narrow accumulator update per grid step (vs. full-width before).
    acc_pt[...] += pt_l
    acc_p[...] += p_l
    acc_t[...] += t_l
    acc_pp[...] += pp_l

    # Ragged tail: only occurs when block_d == full D and D % 128 != 0 (nk == 1),
    # so the partial sums below are always consumed in this same invocation.
    tail_pt = tail_p = tail_t = tail_pp = 0.0
    if tail:
        pc = p_ref[:, full_chunks * 128:block_d].astype(jnp.float32)
        tc = t_ref[:, full_chunks * 128:block_d].astype(jnp.float32)
        tail_pt = jnp.sum(pc * tc, axis=1, keepdims=True)
        tail_p = jnp.sum(pc, axis=1, keepdims=True)
        tail_t = jnp.sum(tc, axis=1, keepdims=True)
        tail_pp = jnp.sum(pc * pc, axis=1, keepdims=True)

    @pl.when(k == nk - 1)
    def _():
        inter = jnp.sum(acc_pt[...], axis=1, keepdims=True) + tail_pt   # (n_blk, 1)
        sum_p = jnp.sum(acc_p[...], axis=1, keepdims=True) + tail_p
        sum_t = jnp.sum(acc_t[...], axis=1, keepdims=True) + tail_t
        sq = jnp.sum(acc_pp[...], axis=1, keepdims=True) + tail_pp

        # fps = sum(p*(1-t)) = sum(p) - inter ; fns = sum((1-p)*t) = sum(t) - inter
        fps = sum_p - inter
        fns = sum_t - inter
        numerator = inter + eps
        denominator = inter + alpha * fps + beta * fns
        tversky_loss = 1.0 - numerator / (denominator + eps)
        energy = jnp.sqrt(sq)                        # ||predict||_2 per row

        # Binary-target assumption: int(max(t)) == 1  <=>  sum(t) > 0.
        # TODO(synk): soft targets in (0,1) would need a running max accumulator.
        loss_row = jnp.where(sum_t > 0.0, tversky_loss, energy)         # (n_blk, 1)
        # gamma == 1 in the module -> pow(gamma) is the identity.
        out_ref[...] = loss_row.astype(out_ref.dtype)


def tversky_loss_stepwise(predict, target, *, alpha=0.5, beta=0.5, eps=1e-6,
                          reduction='mean', block_d_cap=4096, row_block_cap=32):
    """Pallas implementation of TverskyLossStepWise.forward (gamma == 1)."""
    n = predict.shape[0]
    p = predict.reshape(n, -1)               # native dtype; cast per tile in-kernel
    t = target.reshape(n, -1)
    d = p.shape[1]
    if t.shape != (n, d):
        raise ValueError("predict and target must flatten to the same (N, D)")

    # ---- feature (lane) axis tiling -----------------------------------------
    if d <= block_d_cap:
        block_d = d                           # full-extent block: legal for any d
        num_kb = 1
        mask_cols = False
    else:
        block_d = max(128, (block_d_cap // 128) * 128)
        num_kb = _cdiv(d, block_d)
        mask_cols = (d % block_d) != 0        # trailing partial block -> mask lanes

    # ---- row (sublane) axis tiling -------------------------------------------
    # Tiled row blocks need a sublane multiple of 8 * (4 // itemsize) for packed
    # dtypes; full-extent blocks (n_blk == n) are exempt.
    min_itemsize = min(jnp.dtype(p.dtype).itemsize, jnp.dtype(t.dtype).itemsize)
    sub = 8 * max(1, 4 // max(1, int(min_itemsize)))
    if n <= row_block_cap:
        n_blk, num_rb = n, 1
        # v7x megacore: give the "parallel" row axis >= 2 blocks when there is
        # enough per-row work for the split to matter.
        if n > sub and d >= 1024:
            cand = _round_up(_cdiv(n, 2), sub)
            if cand < n:
                n_blk, num_rb = cand, _cdiv(n, cand)
    else:
        n_blk = max(sub, (row_block_cap // sub) * sub)
        num_rb = _cdiv(n, n_blk)

    kernel = functools.partial(_tversky_stepwise_kernel,
                               alpha=float(alpha), beta=float(beta),
                               eps=float(eps), d_total=d, block_d=block_d,
                               mask_cols=mask_cols)

    per_row = pl.pallas_call(
        kernel,
        out_shape=jax.ShapeDtypeStruct((num_rb * n_blk, 1), jnp.float32),
        grid_spec=pltpu.PrefetchScalarGridSpec(
            num_scalar_prefetch=0,
            grid=(num_rb, num_kb),
            in_specs=[pl.BlockSpec((n_blk, block_d), lambda i, k: (i, k)),
                      pl.BlockSpec((n_blk, block_d), lambda i, k: (i, k))],
            out_specs=pl.BlockSpec((n_blk, 1), lambda i, k: (i, 0)),
            scratch_shapes=[pltpu.VMEM((n_blk, 128), jnp.float32)] * 4,
        ),
        compiler_params=pltpu.CompilerParams(
            dimension_semantics=("parallel", "arbitrary")),
    )(p, t)

    per_row = per_row[:n, 0]                 # drop partial-row-block garbage rows
    if reduction == 'mean':
        return jnp.mean(per_row)             # divides by the TRUE N
    elif reduction == 'sum':
        return jnp.sum(per_row)
    elif reduction == 'none':
        return per_row
    else:
        raise ValueError(f"Unexpected reduction {reduction!r}")


def _reference_per_row(predict, target, alpha=0.5, beta=0.5, eps=1e-6):
    """Pure-JAX transcription of the PyTorch forward (per-row loss, gamma == 1)."""
    n = predict.shape[0]
    p = predict.reshape(n, -1).astype(jnp.float32)
    t = target.reshape(n, -1).astype(jnp.float32)
    inter = jnp.sum(p * t, axis=1)
    fps = jnp.sum(p * (1.0 - t), axis=1)
    fns = jnp.sum((1.0 - p) * t, axis=1)
    tversky_loss = 1.0 - (inter + eps) / (inter + alpha * fps + beta * fns + eps)
    energy = jnp.linalg.norm(p, axis=1)
    label = jnp.max(t, axis=1).astype(jnp.int32)
    one_hot = jax.nn.one_hot(label, 2, dtype=jnp.float32)
    comb = jnp.stack([energy, tversky_loss], axis=0)     # (2, N)
    return jnp.sum(one_hot * comb.T, axis=1)             # (N,)


if __name__ == "__main__":
    def _make(key, shape, zero_first_row=True, tgt_dtype=jnp.float32):
        kp, kt = jax.random.split(key)
        predict = jax.nn.sigmoid(jax.random.normal(kp, shape, jnp.float32))
        target = (jax.random.uniform(kt, shape) > 0.5).astype(tgt_dtype)
        if zero_first_row:
            target = target.at[0].set(0)      # exercise the energy (label==0) branch
        return predict, target

    def _check(name, predict, target, **kw):
        out = jax.block_until_ready(tversky_loss_stepwise(predict, target, **kw))
        ref = jnp.mean(_reference_per_row(predict, target,
                                          kw.get('alpha', 0.5), kw.get('beta', 0.5)))
        assert jnp.allclose(out, ref, atol=5e-5, rtol=5e-5), (name, out, ref)

    root = jax.random.PRNGKey(0)
    k1, k2, k3, k4, k5 = jax.random.split(root, 5)

    # 1) Step-wise shape from iESPnet usage: N=8 rows, D = 16*16 = 256.
    p1, t1 = _make(k1, (8, 16, 16))
    _check("aligned", p1, t1, alpha=0.5, beta=0.5)

    # 2) reduction='none' (per-row losses).
    out_none = jax.block_until_ready(
        tversky_loss_stepwise(p1, t1, alpha=0.5, beta=0.5, reduction='none'))
    ref_none = _reference_per_row(p1, t1, 0.5, 0.5)
    assert jnp.allclose(out_none, ref_none, atol=5e-5, rtol=5e-5)

    # 3) Native-dtype passthrough: bf16 binary target, f32 predict.
    _check("bf16_target", p1, t1.astype(jnp.bfloat16), alpha=0.5, beta=0.5)

    # 4) Non-aligned small shape (N=5, D=13*17=221): full-extent blocks, ragged
    #    128-lane tail, no HBM padding copies.
    p2, t2 = _make(k2, (5, 13, 17))
    _check("unaligned_small", p2, t2, alpha=0.5, beta=0.5)

    # 5) Tiled rows + multi-step feature reduction (aligned): exercises the
    #    accumulator init/epilogue across the "arbitrary" k axis.
    p3, t3 = _make(k3, (48, 512))
    _check("tiled_aligned", p3, t3, alpha=0.3, beta=0.7,
           block_d_cap=128, row_block_cap=16)

    # 6) Tiled + unaligned in both dims: partial trailing blocks and the
    #    in-kernel lane mask (no jnp.pad anywhere).
    p4, t4 = _make(k4, (40, 300))
    _check("tiled_masked", p4, t4, alpha=0.5, beta=0.5,
           block_d_cap=128, row_block_cap=16)

    # 7) v7x megacore row split path (small N, large D -> 2 row blocks).
    p5, t5 = _make(k5, (24, 2048))
    _check("row_split", p5, t5, alpha=0.5, beta=0.5)

    print("KERNEL_OK")
</pallas_src>

<mosaic_0001>
module attributes {stable_mosaic.version = 11 : i64} {
  func.func @_tversky_stepwise_kernel(%arg0: i32, %arg1: i32, %arg2: memref<8x256xf32, #tpu.memory_space<vmem>>, %arg3: memref<8x256xf32, #tpu.memory_space<vmem>>, %arg4: memref<8x1xf32, #tpu.memory_space<vmem>>, %arg5: memref<8x128xf32, #tpu.memory_space<vmem>>, %arg6: memref<8x128xf32, #tpu.memory_space<vmem>>, %arg7: memref<8x128xf32, #tpu.memory_space<vmem>>, %arg8: memref<8x128xf32, #tpu.memory_space<vmem>>) attributes {dimension_semantics = [#tpu.dimension_semantics<parallel>, #tpu.dimension_semantics<arbitrary>], iteration_bounds = array<i64: 1, 1>, scalar_prefetch = 0 : i64, scratch_operands = 4 : i64, tpu.core_type = #tpu.core_type<tc>, window_params = [{transform_indices = @transform_0, window_bounds = array<i64: 8, 256>}, {transform_indices = @transform_1, window_bounds = array<i64: 8, 256>}, {transform_indices = @transform_2, window_bounds = array<i64: 8, 1>}]} {
    %c0_i32 = arith.constant 0 : i32
    %0 = arith.cmpi eq, %arg1, %c0_i32 : i32
    %1 = arith.extui %0 : i1 to i32
    %c0_i32_0 = arith.constant 0 : i32
    %2 = arith.cmpi ne, %1, %c0_i32_0 : i32
    scf.if %2 {
      %cst_28 = arith.constant 0.000000e+00 : f32
      %38 = vector.broadcast %cst_28 : f32 to vector<8x128xf32>
      %c0_29 = arith.constant 0 : index
      %c0_30 = arith.constant 0 : index
      %39 = vector.load %arg5[%c0_29, %c0_30] : memref<8x128xf32, #tpu.memory_space<vmem>>, vector<8x128xf32>
      tpu.vector_store %arg5[%c0_29, %c0_30], %38 {strides = array<i32>} : memref<8x128xf32, #tpu.memory_space<vmem>>, vector<8x128xf32>,
      %cst_31 = arith.constant 0.000000e+00 : f32
      %40 = vector.broadcast %cst_31 : f32 to vector<8x128xf32>
      %c0_32 = arith.constant 0 : index
      %c0_33 = arith.constant 0 : index
      %41 = vector.load %arg6[%c0_32, %c0_33] : memref<8x128xf32, #tpu.memory_space<vmem>>, vector<8x128xf32>
      tpu.vector_store %arg6[%c0_32, %c0_33], %40 {strides = array<i32>} : memref<8x128xf32, #tpu.memory_space<vmem>>, vector<8x128xf32>,
      %cst_34 = arith.constant 0.000000e+00 : f32
      %42 = vector.broadcast %cst_34 : f32 to vector<8x128xf32>
      %c0_35 = arith.constant 0 : index
      %c0_36 = arith.constant 0 : index
      %43 = vector.load %arg7[%c0_35, %c0_36] : memref<8x128xf32, #tpu.memory_space<vmem>>, vector<8x128xf32>
      tpu.vector_store %arg7[%c0_35, %c0_36], %42 {strides = array<i32>} : memref<8x128xf32, #tpu.memory_space<vmem>>, vector<8x128xf32>,
      %cst_37 = arith.constant 0.000000e+00 : f32
      %44 = vector.broadcast %cst_37 : f32 to vector<8x128xf32>
      %c0_38 = arith.constant 0 : index
      %c0_39 = arith.constant 0 : index
      %45 = vector.load %arg8[%c0_38, %c0_39] : memref<8x128xf32, #tpu.memory_space<vmem>>, vector<8x128xf32>
      tpu.vector_store %arg8[%c0_38, %c0_39], %44 {strides = array<i32>} : memref<8x128xf32, #tpu.memory_space<vmem>>, vector<8x128xf32>,
    } else {
    }
    %cst = arith.constant 0.000000e+00 : f32
    %3 = vector.broadcast %cst : f32 to vector<8x128xf32>
    %cst_1 = arith.constant 0.000000e+00 : f32
    %4 = vector.broadcast %cst_1 : f32 to vector<8x128xf32>
    %cst_2 = arith.constant 0.000000e+00 : f32
    %5 = vector.broadcast %cst_2 : f32 to vector<8x128xf32>
    %cst_3 = arith.constant 0.000000e+00 : f32
    %6 = vector.broadcast %cst_3 : f32 to vector<8x128xf32>
    %c0 = arith.constant 0 : index
    %c0_4 = arith.constant 0 : index
    %7 = vector.load %arg2[%c0, %c0_4] : memref<8x256xf32, #tpu.memory_space<vmem>>, vector<8x128xf32>
    %c0_5 = arith.constant 0 : index
    %c0_6 = arith.constant 0 : index
    %8 = vector.load %arg3[%c0_5, %c0_6] : memref<8x256xf32, #tpu.memory_space<vmem>>, vector<8x128xf32>
    %9 = arith.mulf %7, %8 : vector<8x128xf32>
    %10 = arith.addf %3, %9 : vector<8x128xf32>
    %11 = arith.addf %4, %7 : vector<8x128xf32>
    %12 = arith.addf %5, %8 : vector<8x128xf32>
    %13 = arith.mulf %7, %7 : vector<8x128xf32>
    %14 = arith.addf %6, %13 : vector<8x128xf32>
    %c0_7 = arith.constant 0 : index
    %c128 = arith.constant 128 : index
    %15 = vector.load %arg2[%c0_7, %c128] : memref<8x256xf32, #tpu.memory_space<vmem>>, vector<8x128xf32>
    %c0_8 = arith.constant 0 : index
    %c128_9 = arith.constant 128 : index
    %16 = vector.load %arg3[%c0_8, %c128_9] : memref<8x256xf32, #tpu.memory_space<vmem>>, vector<8x128xf32>
    %17 = arith.mulf %15, %16 : vector<8x128xf32>
    %18 = arith.addf %10, %17 : vector<8x128xf32>
    %19 = arith.addf %11, %15 : vector<8x128xf32>
    %20 = arith.addf %12, %16 : vector<8x128xf32>
    %21 = arith.mulf %15, %15 : vector<8x128xf32>
    %22 = arith.addf %14, %21 : vector<8x128xf32>
    %c0_10 = arith.constant 0 : index
    %c0_11 = arith.constant 0 : index
    %23 = vector.load %arg5[%c0_10, %c0_11] : memref<8x128xf32, #tpu.memory_space<vmem>>, vector<8x128xf32>
    %24 = arith.addf %23, %18 : vector<8x128xf32>
    %c0_12 = arith.constant 0 : index
    %c0_13 = arith.constant 0 : index
    %25 = vector.load %arg5[%c0_12, %c0_13] : memref<8x128xf32, #tpu.memory_space<vmem>>, vector<8x128xf32>
    tpu.vector_store %arg5[%c0_12, %c0_13], %24 {strides = array<i32>} : memref<8x128xf32, #tpu.memory_space<vmem>>, vector<8x128xf32>,
    %c0_14 = arith.constant 0 : index
    %c0_15 = arith.constant 0 : index
    %26 = vector.load %arg6[%c0_14, %c0_15] : memref<8x128xf32, #tpu.memory_space<vmem>>, vector<8x128xf32>
    %27 = arith.addf %26, %19 : vector<8x128xf32>
    %c0_16 = arith.constant 0 : index
    %c0_17 = arith.constant 0 : index
    %28 = vector.load %arg6[%c0_16, %c0_17] : memref<8x128xf32, #tpu.memory_space<vmem>>, vector<8x128xf32>
    tpu.vector_store %arg6[%c0_16, %c0_17], %27 {strides = array<i32>} : memref<8x128xf32, #tpu.memory_space<vmem>>, vector<8x128xf32>,
    %c0_18 = arith.constant 0 : index
    %c0_19 = arith.constant 0 : index
    %29 = vector.load %arg7[%c0_18, %c0_19] : memref<8x128xf32, #tpu.memory_space<vmem>>, vector<8x128xf32>
    %30 = arith.addf %29, %20 : vector<8x128xf32>
    %c0_20 = arith.constant 0 : index
    %c0_21 = arith.constant 0 : index
    %31 = vector.load %arg7[%c0_20, %c0_21] : memref<8x128xf32, #tpu.memory_space<vmem>>, vector<8x128xf32>
    tpu.vector_store %arg7[%c0_20, %c0_21], %30 {strides = array<i32>} : memref<8x128xf32, #tpu.memory_space<vmem>>, vector<8x128xf32>,
    %c0_22 = arith.constant 0 : index
    %c0_23 = arith.constant 0 : index
    %32 = vector.load %arg8[%c0_22, %c0_23] : memref<8x128xf32, #tpu.memory_space<vmem>>, vector<8x128xf32>
    %33 = arith.addf %32, %22 : vector<8x128xf32>
    %c0_24 = arith.constant 0 : index
    %c0_25 = arith.constant 0 : index
    %34 = vector.load %arg8[%c0_24, %c0_25] : memref<8x128xf32, #tpu.memory_space<vmem>>, vector<8x128xf32>
    tpu.vector_store %arg8[%c0_24, %c0_25], %33 {strides = array<i32>} : memref<8x128xf32, #tpu.memory_space<vmem>>, vector<8x128xf32>,
    %c0_i32_26 = arith.constant 0 : i32
    %35 = arith.cmpi eq, %arg1, %c0_i32_26 : i32
    %36 = arith.extui %35 : i1 to i32
    %c0_i32_27 = arith.constant 0 : i32
    %37 = arith.cmpi ne, %36, %c0_i32_27 : i32
    scf.if %37 {
      %c0_28 = arith.constant 0 : index
      %c0_29 = arith.constant 0 : index
      %38 = vector.load %arg5[%c0_28, %c0_29] : memref<8x128xf32, #tpu.memory_space<vmem>>, vector<8x128xf32>
      %cst_30 = arith.constant dense<0.000000e+00> : vector<8xf32>
      %39 = vector.multi_reduction <add>, %38, %cst_30 [1] : vector<8x128xf32> to vector<8xf32>
      %40 = vector.shape_cast %39 : vector<8xf32> to vector<8x1xf32>
      %cst_31 = arith.constant 0.000000e+00 : f32
      %41 = vector.broadcast %cst_31 : f32 to vector<8x1xf32>
      %42 = arith.addf %40, %41 : vector<8x1xf32>
      %c0_32 = arith.constant 0 : index
      %c0_33 = arith.constant 0 : index
      %43 = vector.load %arg6[%c0_32, %c0_33] : memref<8x128xf32, #tpu.memory_space<vmem>>, vector<8x128xf32>
      %cst_34 = arith.constant dense<0.000000e+00> : vector<8xf32>
      %44 = vector.multi_reduction <add>, %43, %cst_34 [1] : vector<8x128xf32> to vector<8xf32>
      %45 = vector.shape_cast %44 : vector<8xf32> to vector<8x1xf32>
      %cst_35 = arith.constant 0.000000e+00 : f32
      %46 = vector.broadcast %cst_35 : f32 to vector<8x1xf32>
      %47 = arith.addf %45, %46 : vector<8x1xf32>
      %c0_36 = arith.constant 0 : index
      %c0_37 = arith.constant 0 : index
      %48 = vector.load %arg7[%c0_36, %c0_37] : memref<8x128xf32, #tpu.memory_space<vmem>>, vector<8x128xf32>
      %cst_38 = arith.constant dense<0.000000e+00> : vector<8xf32>
      %49 = vector.multi_reduction <add>, %48, %cst_38 [1] : vector<8x128xf32> to vector<8xf32>
      %50 = vector.shape_cast %49 : vector<8xf32> to vector<8x1xf32>
      %cst_39 = arith.constant 0.000000e+00 : f32
      %51 = vector.broadcast %cst_39 : f32 to vector<8x1xf32>
      %52 = arith.addf %50, %51 : vector<8x1xf32>
      %c0_40 = arith.constant 0 : index
      %c0_41 = arith.constant 0 : index
      %53 = vector.load %arg8[%c0_40, %c0_41] : memref<8x128xf32, #tpu.memory_space<vmem>>, vector<8x128xf32>
      %cst_42 = arith.constant dense<0.000000e+00> : vector<8xf32>
      %54 = vector.multi_reduction <add>, %53, %cst_42 [1] : vector<8x128xf32> to vector<8xf32>
      %55 = vector.shape_cast %54 : vector<8xf32> to vector<8x1xf32>
      %cst_43 = arith.constant 0.000000e+00 : f32
      %56 = vector.broadcast %cst_43 : f32 to vector<8x1xf32>
      %57 = arith.addf %55, %56 : vector<8x1xf32>
      %58 = arith.subf %47, %42 : vector<8x1xf32>
      %59 = arith.subf %52, %42 : vector<8x1xf32>
      %cst_44 = arith.constant 9.99999997E-7 : f32
      %60 = vector.broadcast %cst_44 : f32 to vector<8x1xf32>
      %61 = arith.addf %42, %60 : vector<8x1xf32>
      %cst_45 = arith.constant 5.000000e-01 : f32
      %62 = vector.broadcast %cst_45 : f32 to vector<8x1xf32>
      %63 = arith.mulf %62, %58 : vector<8x1xf32>
      %64 = arith.addf %42, %63 : vector<8x1xf32>
      %cst_46 = arith.constant 5.000000e-01 : f32
      %65 = vector.broadcast %cst_46 : f32 to vector<8x1xf32>
      %66 = arith.mulf %65, %59 : vector<8x1xf32>
      %67 = arith.addf %64, %66 : vector<8x1xf32>
      %cst_47 = arith.constant 9.99999997E-7 : f32
      %68 = vector.broadcast %cst_47 : f32 to vector<8x1xf32>
      %69 = arith.addf %67, %68 : vector<8x1xf32>
      %70 = arith.divf %61, %69 : vector<8x1xf32>
      %cst_48 = arith.constant 1.000000e+00 : f32
      %71 = vector.broadcast %cst_48 : f32 to vector<8x1xf32>
      %72 = arith.subf %71, %70 : vector<8x1xf32>
      %73 = math.sqrt %57 : vector<8x1xf32>
      %cst_49 = arith.constant 0.000000e+00 : f32
      %74 = vector.broadcast %cst_49 : f32 to vector<8x1xf32>
      %75 = arith.cmpf ogt, %52, %74 : vector<8x1xf32>
      %76 = arith.select %75, %72, %73 : vector<8x1xi1>, vector<8x1xf32>
      %c0_50 = arith.constant 0 : index
      %c0_51 = arith.constant 0 : index
      %77 = vector.load %arg4[%c0_50, %c0_51] : memref<8x1xf32, #tpu.memory_space<vmem>>, vector<8x1xf32>
      tpu.vector_store %arg4[%c0_50, %c0_51], %76 {strides = array<i32>} : memref<8x1xf32, #tpu.memory_space<vmem>>, vector<8x1xf32>,
    } else {
    }
    return
  }
  func.func @transform_0(%arg0: i32, %arg1: i32) -> (i32, i32) {
    %c0_i32 = arith.constant 0 : i32
    return %arg0, %arg1 : i32, i32
  }
  func.func @transform_1(%arg0: i32, %arg1: i32) -> (i32, i32) {
    %c0_i32 = arith.constant 0 : i32
    return %arg0, %arg1 : i32, i32
  }
  func.func @transform_2(%arg0: i32, %arg1: i32) -> (i32, i32) {
    %c0_i32 = arith.constant 0 : i32
    %c0_i32_0 = arith.constant 0 : i32
    return %arg0, %c0_i32 : i32, i32
  }
}

</mosaic_0001>

<llo_original>
// kernel: tpu_custom_call.1
$region0: #{tpu_custom_call.1}
  #allocation0 [shape = 'u32[]', space=smem, size = 0x4, offset = 0x4, fixed_abs, tag = 'smem constant byte address 0x4 - core index']
  #allocation1 [shape = 'u32[144,128]{1,0:T(1,128)}', space=vmem, size = 0x12000, scoped, tag = 'internal scratch']
  #allocation2 [shape = 'f32[8,128]{1,0:T(8,128)}', space=vmem, size = 0x1000, scoped, tag = 'scratch operand']
  #allocation3 [shape = 'f32[8,128]{1,0:T(8,128)}', space=vmem, size = 0x1000, scoped, tag = 'scratch operand']
  #allocation4 [shape = 'f32[8,128]{1,0:T(8,128)}', space=vmem, size = 0x1000, scoped, tag = 'scratch operand']
  #allocation5 [shape = 'f32[8,128]{1,0:T(8,128)}', space=vmem, size = 0x1000, scoped, tag = 'scratch operand']
  %s0 = inlined_call_operand.hbm [shape: f32[8,256], index: 0, kind: input, shape index: {}]
  %s1 = inlined_call_operand.hbm [shape: f32[8,256], index: 1, kind: input, shape index: {}]
  %s2 = inlined_call_operand.vmem [shape: f32[8,1], index: 2, kind: output, shape index: {}]
  %s3 = sld [smem:[#allocation0]]
  $region34: #{tpu_custom_call.1} parent=0
    _
  %s5 = ssub.s32 1, %s3
  %s6 = scalar_select 0, %s5, %s3
  $region1: #{tpu_custom_call.1} parent=0
    #allocation6 [shape = 'u8[8192]{0}', space=vmem, size = 0x2000, scoped, tag = 'input window, operand 0, single buffered']
    #allocation7 [shape = 's32[1]{0}', space=sflag, size = 0x4, scoped, tag = 'scoped memory for tpu_custom_call.1']
    #allocation8 [shape = 'u8[8192]{0}', space=vmem, size = 0x2000, scoped, tag = 'input window, operand 1, single buffered']
    #allocation9 [shape = 's32[1]{0}', space=sflag, size = 0x4, scoped, tag = 'scoped memory for tpu_custom_call.1']
    %7 = vsyncpa [#allocation7], 0
    %8 = vsyncpa [#allocation9], 0
    // Predicated region
    $region2: #{tpu_custom_call.1} parent=1 // pred_check
      _
    $region3: #{tpu_custom_call.1} parent=1 // pred_check_branch
      %10 = sbr.rel (0) target = $region5
    $region4: #{tpu_custom_call.1} parent=1 // pred_region
      %s12 = ssub.s32 256, 256
      %13 = vsyncadd [#allocation7], %s12
      %s15 = sshll.u32 [#allocation6], 4
      %s16 = int_to_ptr.vmem [resolvable:$true] %s15
      %18 = dma.hbm_to_vmem [thread:$0]  %s0, 256, %s16, [#allocation7]
    $region5: #{tpu_custom_call.1} parent=1 // pred_fallthru
      _
    // Predicated region
    $region6: #{tpu_custom_call.1} parent=1 // pred_check
      _
    $region7: #{tpu_custom_call.1} parent=1 // pred_check_branch
      %20 = sbr.rel (0) target = $region9
    $region8: #{tpu_custom_call.1} parent=1 // pred_region
      %s22 = ssub.s32 256, 256
      %23 = vsyncadd [#allocation9], %s22
      %s25 = sshll.u32 [#allocation8], 4
      %s26 = int_to_ptr.vmem [resolvable:$true] %s25
      %28 = dma.hbm_to_vmem [thread:$0]  %s1, 256, %s26, [#allocation9]
    $region9: #{tpu_custom_call.1} parent=1 // pred_fallthru
      _
    // Predicated region
    $region10: #{tpu_custom_call.1} parent=1 // pred_check
      _
    $region11: #{tpu_custom_call.1} parent=1 // pred_check_branch
      %30 = sbr.rel (0) target = $region13
    $region12: #{tpu_custom_call.1} parent=1 // pred_region
      %31 = dma.done [#allocation7], 256
    $region13: #{tpu_custom_call.1} parent=1 // pred_fallthru
      _
    // Predicated region
    $region14: #{tpu_custom_call.1} parent=1 // pred_check
      _
    $region15: #{tpu_custom_call.1} parent=1 // pred_check_branch
      %33 = sbr.rel (0) target = $region17
    $region16: #{tpu_custom_call.1} parent=1 // pred_region
      %34 = dma.done [#allocation9], 256
    $region17: #{tpu_custom_call.1} parent=1 // pred_fallthru
      _
    %p35 = scmp.eq.s32.totalorder 0, 0
    // Predicated region
    $region18: #{tpu_custom_call.1} parent=1 // pred_check
      %p36 = pneg %p35
    $region19: #{tpu_custom_call.1} parent=1 // pred_check_branch
      %38 = sbr.rel (%p36) target = $region21
    $region20: #{tpu_custom_call.1} parent=1 // pred_region
      %39 = vst [vmem:[#allocation2] sm:$0xff] 0.0
      %40 = vst [vmem:[#allocation3] sm:$0xff] 0.0
      %41 = vst [vmem:[#allocation4] sm:$0xff] 0.0
      %42 = vst [vmem:[#allocation5] sm:$0xff] 0.0
    $region21: #{tpu_custom_call.1} parent=1 // pred_fallthru
      _
    %v43 = vld [vmem:[#allocation6] sm:$0xff]
    %v44 = vld [vmem:[#allocation8] sm:$0xff]
    %v45 = vmul.f32 %v43, %v44
    %v46 = vadd.f32 %v45, 0.0
    %v47 = vadd.f32 %v43, 0.0
    %v48 = vadd.f32 %v44, 0.0
    %v49 = vmul.f32 %v43, %v43
    %v50 = vadd.f32 %v49, 0.0
    %v51 = vld [vmem:[#allocation6 + $0x8] sm:$0xff]
    %v52 = vld [vmem:[#allocation8 + $0x8] sm:$0xff]
    %v53 = vmul.f32 %v51, %v52
    %v54 = vadd.f32 %v46, %v53
    %v55 = vadd.f32 %v47, %v51
    %v56 = vadd.f32 %v48, %v52
    %v57 = vmul.f32 %v51, %v51
    %v58 = vadd.f32 %v50, %v57
    %v59 = vld [vmem:[#allocation2] sm:$0xff]
    %v60 = vadd.f32 %v59, %v54
    %61 = vst [vmem:[#allocation2] sm:$0xff] %v60
    %v62 = vld [vmem:[#allocation3] sm:$0xff]
    %v63 = vadd.f32 %v62, %v55
    %64 = vst [vmem:[#allocation3] sm:$0xff] %v63
    %v65 = vld [vmem:[#allocation4] sm:$0xff]
    %v66 = vadd.f32 %v65, %v56
    %67 = vst [vmem:[#allocation4] sm:$0xff] %v66
    %v68 = vld [vmem:[#allocation5] sm:$0xff]
    %v69 = vadd.f32 %v68, %v58
    %70 = vst [vmem:[#allocation5] sm:$0xff] %v69
    // Predicated region
    $region22: #{tpu_custom_call.1} parent=1 // pred_check
      %p71 = pneg %p35
    $region23: #{tpu_custom_call.1} parent=1 // pred_check_branch
      %73 = sbr.rel (%p71) target = $region25
    $region24: #{tpu_custom_call.1} parent=1 // pred_region
      %v74 = vld [vmem:[#allocation2] sm:$0xff]
      %75 = vadd.xlane.f32.xlu0 %v74
      %v76 = vpop.xlane.xlu0 %75
      %v77 = vadd.f32 %v76, 0.0
      %v78 = vld [vmem:[#allocation3] sm:$0xff]
      %79 = vadd.xlane.f32.xlu0 %v78
      %v80 = vpop.xlane.xlu0 %79
      %v81 = vadd.f32 %v80, 0.0
      %v82 = vld [vmem:[#allocation4] sm:$0xff]
      %83 = vadd.xlane.f32.xlu0 %v82
      %v84 = vpop.xlane.xlu0 %83
      %v85 = vadd.f32 %v84, 0.0
      %v86 = vld [vmem:[#allocation5] sm:$0xff]
      %87 = vadd.xlane.f32.xlu0 %v86
      %v88 = vpop.xlane.xlu0 %87
      %v89 = vadd.f32 %v88, 0.0
      %v90 = vsub.f32 %v81, %v77
      %v91 = vsub.f32 %v85, %v77
      %v92 = vadd.f32 %v77, 1e-06
      %v93 = vmul.f32 %v90, 0.5
      %v94 = vadd.f32 %v77, %v93
      %v95 = vmul.f32 %v91, 0.5
      %v96 = vadd.f32 %v94, %v95
      %v97 = vadd.f32 %v96, 1e-06
      %v98 = vrcp.pop %v97
      %v99 = vmul.f32 %v92, %v98
      %v100 = vsub.f32 1.0, %v99
      %v101 = vrsqrt.pop %v89
      %v102 = vmul.f32 %v89, %v101
      %vm103 = vcmp.eq.f32.partialorder %v89, inf
      %v104 = vsel %vm103, %v89, %v102
      %vm105 = vcmp.eq.f32.partialorder %v89, 0.0
      %v106 = vand.u32 %v89, 2147483648
      %v107 = vsel %vm105, %v106, %v104
      %vm108 = vcmp.gt.f32.partialorder %v85, 0.0
      %v109 = vsel %vm108, %v100, %v107
      %vm110 = vcmask 7168
      %111 = vst.msk [vmem:[%s2] sm:$0xff] %vm110, %v109
    $region25: #{tpu_custom_call.1} parent=1 // pred_fallthru
      _
    // Predicated region
    $region26: #{tpu_custom_call.1} parent=1 // pred_check
      _
    $region27: #{tpu_custom_call.1} parent=1 // pred_check_branch
      %113 = sbr.rel (0) target = $region29
    $region28: #{tpu_custom_call.1} parent=1 // pred_region
      _
    $region29: #{tpu_custom_call.1} parent=1 // pred_fallthru
      _
    // Predicated region
    $region30: #{tpu_custom_call.1} parent=1 // pred_check
      _
    $region31: #{tpu_custom_call.1} parent=1 // pred_check_branch
      %115 = sbr.rel (0) target = $region33
    $region32: #{tpu_custom_call.1} parent=1 // pred_region
      _
    $region33: #{tpu_custom_call.1} parent=1 // pred_fallthru
      _
    %116 = vsyncpa [#allocation7], 1
    %117 = vsyncpa [#allocation9], 1

</llo_original>
